<compile_context>
chip_gen: v6e
topology: v6e:2x2x1
jax: 0.10.0
libtpu: 0.0.40
codegen_flags: <defaults>
</compile_context>

<pallas_src>
import functools

import jax
import jax.numpy as jnp
from jax.experimental import pallas as pl
from jax.experimental.pallas import tpu as pltpu

LANE = 128
SUBLANE = 8


def _round_up(n, m):
    return ((n + m - 1) // m) * m


def actor_critic_kernel(x_ref, w1_ref, b1_ref, wh_ref, bh_ref,
                        logits_ref, value_ref, *, action_dim):
    # fc1 -> ReLU.  f32 accumulation; bias-add / ReLU in f32 (single broadcast
    # add, fine on v5e which has no bf16 VPU path).
    h = jnp.dot(x_ref[...], w1_ref[...], preferred_element_type=jnp.float32)
    h = jnp.maximum(h + b1_ref[...], 0.0)                       # (TILE_B, H_pad) f32

    # Fused actor|critic head: one MXU pass; lanes [0, A) = logits, lane A = value.
    out = jnp.dot(h.astype(wh_ref.dtype), wh_ref[...],
                  preferred_element_type=jnp.float32) + bh_ref[...]

    # Epilogue split fused in-kernel -> two narrow stores instead of a 128-lane slab.
    logits_ref[...] = out[:, :action_dim].astype(logits_ref.dtype)
    value_ref[...] = out[:, action_dim:action_dim + 1].astype(value_ref.dtype)


def init_params(key, state_dim, hidden_dim, action_dim):
    """Unpadded params, (in, out) layout (transposed vs. PyTorch Linear)."""
    k1, k2, k3, k4, k5, k6 = jax.random.split(key, 6)

    def u(k, shape, fan_in):
        bound = 1.0 / jnp.sqrt(fan_in)
        return jax.random.uniform(k, shape, jnp.float32, -bound, bound)

    w1 = u(k1, (state_dim, hidden_dim), state_dim)
    b1 = u(k2, (1, hidden_dim), state_dim)
    wa = u(k3, (hidden_dim, action_dim), hidden_dim)
    ba = u(k4, (1, action_dim), hidden_dim)
    wc = u(k5, (hidden_dim, 1), hidden_dim)
    bc = u(k6, (1, 1), hidden_dim)
    return w1, b1, wa, ba, wc, bc


def pack_params(w1, b1, wa, ba, wc, bc, dtype=jnp.float32):
    """Fuse actor|critic into one head; pad only the (tiny, VMEM-resident)
    weight lane dims to 128.  x's feature dim S is NOT padded.

    Use dtype=jnp.bfloat16 on v6e/v7x (f32 accumulation keeps accuracy); biases
    stay f32 (added on the f32 accumulator).
    """
    S, H = w1.shape
    A = wa.shape[1]
    H_pad = _round_up(H, LANE)
    O_pad = _round_up(A + 1, LANE)          # logits | value | zero padding

    w1p = jnp.zeros((S, H_pad), dtype).at[:, :H].set(w1.astype(dtype))
    b1p = jnp.zeros((1, H_pad), jnp.float32).at[:, :H].set(b1.astype(jnp.float32))

    whp = jnp.zeros((H_pad, O_pad), dtype)
    whp = whp.at[:H, :A].set(wa.astype(dtype))
    whp = whp.at[:H, A:A + 1].set(wc.astype(dtype))

    bhp = jnp.zeros((1, O_pad), jnp.float32)
    bhp = bhp.at[:, :A].set(ba.astype(jnp.float32))
    bhp = bhp.at[:, A:A + 1].set(bc.astype(jnp.float32))
    return w1p, b1p, whp, bhp


@functools.partial(jax.jit, static_argnames=("action_dim",))
def actor_critic_forward(x, w1p, b1p, whp, bhp, *, action_dim):
    B, S = x.shape
    H_pad = w1p.shape[1]
    O_pad = whp.shape[1]
    compute_dtype = w1p.dtype

    # Pad batch only to the sublane multiple (<= 7 rows), never to a whole tile.
    B_pad = _round_up(max(B, 1), SUBLANE)
    x_p = x.astype(compute_dtype)
    if B_pad != B:
        x_p = jnp.pad(x_p, ((0, B_pad - B), (0, 0)))

    # >= 2 grid steps for mid-size batches so the "parallel" batch axis lands on
    # both v7x TensorCores; cap at 1024 rows/tile (0.35 us/step is then noise and
    # 2 bufs x 1024 x S x 4B stays tiny in VMEM).  cdiv grid: last tile may be
    # partial; its garbage rows only feed masked output rows.
    TILE_B = min(1024, max(SUBLANE, _round_up(pl.cdiv(B_pad, 2), SUBLANE)))
    grid = (pl.cdiv(B_pad, TILE_B),)

    flops = 2 * B_pad * (S * H_pad + H_pad * O_pad)
    bytes_accessed = (
        x_p.size * x_p.dtype.itemsize
        + w1p.size * w1p.dtype.itemsize + b1p.size * 4
        + whp.size * whp.dtype.itemsize + bhp.size * 4
        + B_pad * (action_dim + 1) * 4)

    logits, value = pl.pallas_call(
        functools.partial(actor_critic_kernel, action_dim=action_dim),
        out_shape=(jax.ShapeDtypeStruct((B_pad, action_dim), jnp.float32),
                   jax.ShapeDtypeStruct((B_pad, 1), jnp.float32)),
        grid=grid,
        in_specs=[
            pl.BlockSpec((TILE_B, S), lambda i: (i, 0)),       # x: batch-tiled stream
            pl.BlockSpec((S, H_pad), lambda i: (0, 0)),        # w1: VMEM-resident
            pl.BlockSpec((1, H_pad), lambda i: (0, 0)),        # b1: resident
            pl.BlockSpec((H_pad, O_pad), lambda i: (0, 0)),    # fused actor|critic W
            pl.BlockSpec((1, O_pad), lambda i: (0, 0)),        # fused actor|critic b
        ],
        out_specs=(pl.BlockSpec((TILE_B, action_dim), lambda i: (i, 0)),
                   pl.BlockSpec((TILE_B, 1), lambda i: (i, 0))),
        compiler_params=pltpu.CompilerParams(
            dimension_semantics=("parallel",),    # shard batch tiles across TCs
        ),
        cost_estimate=pl.CostEstimate(
            flops=flops, transcendentals=0, bytes_accessed=bytes_accessed),
    )(x_p, w1p, b1p, whp, bhp)

    if B_pad != B:
        logits = logits[:B]
        value = value[:B]
    return logits, value


if __name__ == "__main__":
    state_dim, hidden_dim, action_dim = 16, 32, 8
    batch = 4

    key = jax.random.PRNGKey(0)
    kx, kp = jax.random.split(key)
    x = jax.random.normal(kx, (batch, state_dim), jnp.float32)
    w1, b1, wa, ba, wc, bc = init_params(kp, state_dim, hidden_dim, action_dim)

    # Reference in plain JAX (unpadded, unfused params).
    h_ref = jnp.maximum(x @ w1 + b1, 0.0)
    logits_ref = h_ref @ wa + ba
    value_ref = h_ref @ wc + bc

    # f32 path (default): tight check.
    packed_f32 = pack_params(w1, b1, wa, ba, wc, bc)
    logits, value = actor_critic_forward(x, *packed_f32, action_dim=action_dim)
    jax.block_until_ready((logits, value))
    assert logits.shape == (batch, action_dim)
    assert value.shape == (batch, 1)
    assert jnp.allclose(logits, logits_ref, atol=1e-5, rtol=1e-5)
    assert jnp.allclose(value, value_ref, atol=1e-5, rtol=1e-5)

    # bf16 weight/activation path (production v6e/v7x): loose check.
    packed_bf16 = pack_params(w1, b1, wa, ba, wc, bc, dtype=jnp.bfloat16)
    logits_bf, value_bf = actor_critic_forward(x, *packed_bf16, action_dim=action_dim)
    jax.block_until_ready((logits_bf, value_bf))
    assert jnp.allclose(logits_bf, logits_ref, atol=1e-1, rtol=1e-1)
    assert jnp.allclose(value_bf, value_ref, atol=1e-1, rtol=1e-1)

    # TODO(synk): softmax / Categorical sampling from get_action_and_value stays in
    # plain JAX outside the kernel (not part of the module's forward()).
    print("KERNEL_OK")
</pallas_src>

<mosaic_0001>
module attributes {stable_mosaic.version = 11 : i64} {
  func.func @actor_critic_kernel(%arg0: i32, %arg1: memref<8x16xf32, #tpu.memory_space<vmem>>, %arg2: memref<16x128xf32, #tpu.memory_space<vmem>>, %arg3: memref<1x128xf32, #tpu.memory_space<vmem>>, %arg4: memref<128x128xf32, #tpu.memory_space<vmem>>, %arg5: memref<1x128xf32, #tpu.memory_space<vmem>>, %arg6: memref<8x8xf32, #tpu.memory_space<vmem>>, %arg7: memref<8x1xf32, #tpu.memory_space<vmem>>) attributes {dimension_semantics = [#tpu.dimension_semantics<parallel>], iteration_bounds = array<i64: 1>, scalar_prefetch = 0 : i64, scratch_operands = 0 : i64, tpu.core_type = #tpu.core_type<tc>, window_params = [{transform_indices = @transform_0, window_bounds = array<i64: 8, 16>}, {pipeline_mode = #tpu.pipeline_mode<synchronous>, transform_indices = @transform_1, window_bounds = array<i64: 16, 128>}, {pipeline_mode = #tpu.pipeline_mode<synchronous>, transform_indices = @transform_2, window_bounds = array<i64: 1, 128>}, {pipeline_mode = #tpu.pipeline_mode<synchronous>, transform_indices = @transform_3, window_bounds = array<i64: 128, 128>}, {pipeline_mode = #tpu.pipeline_mode<synchronous>, transform_indices = @transform_4, window_bounds = array<i64: 1, 128>}, {transform_indices = @transform_5, window_bounds = array<i64: 8, 8>}, {transform_indices = @transform_6, window_bounds = array<i64: 8, 1>}]} {
    %c0 = arith.constant 0 : index
    %c0_0 = arith.constant 0 : index
    %0 = vector.load %arg1[%c0, %c0_0] : memref<8x16xf32, #tpu.memory_space<vmem>>, vector<8x16xf32>
    %c0_1 = arith.constant 0 : index
    %c0_2 = arith.constant 0 : index
    %1 = vector.load %arg2[%c0_1, %c0_2] : memref<16x128xf32, #tpu.memory_space<vmem>>, vector<16x128xf32>
    %cst = arith.constant dense<0.000000e+00> : vector<8x128xf32>
    %2 = tpu.matmul %0, %1, %cst {dimension_numbers = #tpu.dot_dimension_numbers<[1], [0], [0], [1], [0, 0, 1, 1], [], []>} : vector<8x16xf32>, vector<16x128xf32>, vector<8x128xf32> -> vector<8x128xf32>
    %c0_3 = arith.constant 0 : index
    %c0_4 = arith.constant 0 : index
    %3 = vector.load %arg3[%c0_3, %c0_4] : memref<1x128xf32, #tpu.memory_space<vmem>>, vector<1x128xf32>
    %4 = vector.broadcast %3 : vector<1x128xf32> to vector<8x128xf32>
    %5 = arith.addf %2, %4 : vector<8x128xf32>
    %cst_5 = arith.constant 0.000000e+00 : f32
    %6 = vector.broadcast %cst_5 : f32 to vector<8x128xf32>
    %7 = arith.maximumf %5, %6 : vector<8x128xf32>
    %c0_6 = arith.constant 0 : index
    %c0_7 = arith.constant 0 : index
    %8 = vector.load %arg4[%c0_6, %c0_7] : memref<128x128xf32, #tpu.memory_space<vmem>>, vector<128x128xf32>
    %cst_8 = arith.constant dense<0.000000e+00> : vector<8x128xf32>
    %9 = tpu.matmul %7, %8, %cst_8 {dimension_numbers = #tpu.dot_dimension_numbers<[1], [0], [0], [1], [0, 0, 1, 1], [], []>} : vector<8x128xf32>, vector<128x128xf32>, vector<8x128xf32> -> vector<8x128xf32>
    %c0_9 = arith.constant 0 : index
    %c0_10 = arith.constant 0 : index
    %10 = vector.load %arg5[%c0_9, %c0_10] : memref<1x128xf32, #tpu.memory_space<vmem>>, vector<1x128xf32>
    %11 = vector.broadcast %10 : vector<1x128xf32> to vector<8x128xf32>
    %12 = arith.addf %9, %11 : vector<8x128xf32>
    %13 = vector.extract_strided_slice %12 {offsets = [0, 0], sizes = [8, 8], strides = [1, 1]} : vector<8x128xf32> to vector<8x8xf32>
    %c0_11 = arith.constant 0 : index
    %c0_12 = arith.constant 0 : index
    %14 = vector.load %arg6[%c0_11, %c0_12] : memref<8x8xf32, #tpu.memory_space<vmem>>, vector<8x8xf32>
    tpu.vector_store %arg6[%c0_11, %c0_12], %13 {strides = array<i32>} : memref<8x8xf32, #tpu.memory_space<vmem>>, vector<8x8xf32>,
    %15 = vector.extract_strided_slice %12 {offsets = [0, 8], sizes = [8, 1], strides = [1, 1]} : vector<8x128xf32> to vector<8x1xf32>
    %c0_13 = arith.constant 0 : index
    %c0_14 = arith.constant 0 : index
    %16 = vector.load %arg7[%c0_13, %c0_14] : memref<8x1xf32, #tpu.memory_space<vmem>>, vector<8x1xf32>
    tpu.vector_store %arg7[%c0_13, %c0_14], %15 {strides = array<i32>} : memref<8x1xf32, #tpu.memory_space<vmem>>, vector<8x1xf32>,
    return
  }
  func.func @transform_0(%arg0: i32) -> (i32, i32) {
    %c0_i32 = arith.constant 0 : i32
    %c0_i32_0 = arith.constant 0 : i32
    return %arg0, %c0_i32 : i32, i32
  }
  func.func @transform_1(%arg0: i32) -> (i32, i32) {
    %c0_i32 = arith.constant 0 : i32
    %c0_i32_0 = arith.constant 0 : i32
    %c0_i32_1 = arith.constant 0 : i32
    return %c0_i32, %c0_i32_0 : i32, i32
  }
  func.func @transform_2(%arg0: i32) -> (i32, i32) {
    %c0_i32 = arith.constant 0 : i32
    %c0_i32_0 = arith.constant 0 : i32
    %c0_i32_1 = arith.constant 0 : i32
    return %c0_i32, %c0_i32_0 : i32, i32
  }
  func.func @transform_3(%arg0: i32) -> (i32, i32) {
    %c0_i32 = arith.constant 0 : i32
    %c0_i32_0 = arith.constant 0 : i32
    %c0_i32_1 = arith.constant 0 : i32
    return %c0_i32, %c0_i32_0 : i32, i32
  }
  func.func @transform_4(%arg0: i32) -> (i32, i32) {
    %c0_i32 = arith.constant 0 : i32
    %c0_i32_0 = arith.constant 0 : i32
    %c0_i32_1 = arith.constant 0 : i32
    return %c0_i32, %c0_i32_0 : i32, i32
  }
  func.func @transform_5(%arg0: i32) -> (i32, i32) {
    %c0_i32 = arith.constant 0 : i32
    %c0_i32_0 = arith.constant 0 : i32
    return %arg0, %c0_i32 : i32, i32
  }
  func.func @transform_6(%arg0: i32) -> (i32, i32) {
    %c0_i32 = arith.constant 0 : i32
    %c0_i32_0 = arith.constant 0 : i32
    return %arg0, %c0_i32 : i32, i32
  }
}

</mosaic_0001>

<llo_original>
// kernel: actor_critic_forward.1
$region0: #{actor_critic_forward.1}
  #allocation0 [shape = 'u32[]', space=smem, size = 0x4, offset = 0x4, fixed_abs, tag = 'smem constant byte address 0x4 - core index']
  #allocation1 [shape = 'u32[144,128]{1,0:T(1,128)}', space=vmem, size = 0x12000, scoped, tag = 'internal scratch']
  %s0 = inlined_call_operand.vmem [shape: f32[8,16], index: 0, kind: input, shape index: {}]
  %s1 = inlined_call_operand.hbm [shape: f32[16,128], index: 1, kind: input, shape index: {}]
  %s2 = inlined_call_operand.vmem [shape: f32[1,128], index: 2, kind: input, shape index: {}]
  %s3 = inlined_call_operand.hbm [shape: f32[128,128], index: 3, kind: input, shape index: {}]
  %s4 = inlined_call_operand.vmem [shape: f32[1,128], index: 4, kind: input, shape index: {}]
  %s5 = inlined_call_operand.vmem [shape: f32[8,8], index: 5, kind: output, shape index: {0}]
  %s6 = inlined_call_operand.vmem [shape: f32[8,1], index: 6, kind: output, shape index: {1}]
  %7 = xla_tuple %s5, %s6
  %s8 = sld [smem:[#allocation0]]
  $region46: #{actor_critic_forward.1} parent=0
    _
  %s10 = ssub.s32 1, %s8
  %s11 = scalar_select 0, %s10, %s8
  $region1: #{actor_critic_forward.1} parent=0
    #allocation2 [shape = 'u8[8192]{0}', space=vmem, size = 0x2000, scoped, tag = 'input window, operand 1, single buffered']
    #allocation3 [shape = 's32[1]{0}', space=sflag, size = 0x4, scoped, tag = 'scoped memory for actor_critic_forward.1']
    #allocation4 [shape = 'u8[65536]{0}', space=vmem, size = 0x10000, scoped, tag = 'input window, operand 3, single buffered']
    #allocation5 [shape = 's32[1]{0}', space=sflag, size = 0x4, scoped, tag = 'scoped memory for actor_critic_forward.1']
    %12 = vsyncpa [#allocation3], 0
    %13 = vsyncpa [#allocation5], 0
    // Predicated region
    $region2: #{actor_critic_forward.1} parent=1 // pred_check
      _
    $region3: #{actor_critic_forward.1} parent=1 // pred_check_branch
      %15 = sbr.rel (0) target = $region5
    $region4: #{actor_critic_forward.1} parent=1 // pred_region
      _
    $region5: #{actor_critic_forward.1} parent=1 // pred_fallthru
      _
    // Predicated region
    $region6: #{actor_critic_forward.1} parent=1 // pred_check
      _
    $region7: #{actor_critic_forward.1} parent=1 // pred_check_branch
      %17 = sbr.rel (0) target = $region9
    $region8: #{actor_critic_forward.1} parent=1 // pred_region
      %s19 = ssub.s32 256, 256
      %20 = vsyncadd [#allocation3], %s19
      %s21 = sshll.u32 [#allocation2], 4
      %s22 = int_to_ptr.vmem [resolvable:$true] %s21
      %27 = dma.hbm_to_vmem [thread:$0]  %s1, 256, %s22, [#allocation3], 128, 128, 8
    $region9: #{actor_critic_forward.1} parent=1 // pred_fallthru
      _
    // Predicated region
    $region10: #{actor_critic_forward.1} parent=1 // pred_check
      _
    $region11: #{actor_critic_forward.1} parent=1 // pred_check_branch
      %29 = sbr.rel (0) target = $region13
    $region12: #{actor_critic_forward.1} parent=1 // pred_region
      _
    $region13: #{actor_critic_forward.1} parent=1 // pred_fallthru
      _
    // Predicated region
    $region14: #{actor_critic_forward.1} parent=1 // pred_check
      _
    $region15: #{actor_critic_forward.1} parent=1 // pred_check_branch
      %31 = sbr.rel (0) target = $region17
    $region16: #{actor_critic_forward.1} parent=1 // pred_region
      %s33 = ssub.s32 2048, 2048
      %34 = vsyncadd [#allocation5], %s33
      %s35 = sshll.u32 [#allocation4], 4
      %s36 = int_to_ptr.vmem [resolvable:$true] %s35
      %41 = dma.hbm_to_vmem [thread:$0]  %s3, 2048, %s36, [#allocation5], 128, 128, 8
    $region17: #{actor_critic_forward.1} parent=1 // pred_fallthru
      _
    // Predicated region
    $region18: #{actor_critic_forward.1} parent=1 // pred_check
      _
    $region19: #{actor_critic_forward.1} parent=1 // pred_check_branch
      %43 = sbr.rel (0) target = $region21
    $region20: #{actor_critic_forward.1} parent=1 // pred_region
      _
    $region21: #{actor_critic_forward.1} parent=1 // pred_fallthru
      _
    // Predicated region
    $region22: #{actor_critic_forward.1} parent=1 // pred_check
      _
    $region23: #{actor_critic_forward.1} parent=1 // pred_check_branch
      %45 = sbr.rel (0) target = $region25
    $region24: #{actor_critic_forward.1} parent=1 // pred_region
      %46 = dma.done [#allocation3], 256
    $region25: #{actor_critic_forward.1} parent=1 // pred_fallthru
      _
    // Predicated region
    $region26: #{actor_critic_forward.1} parent=1 // pred_check
      _
    $region27: #{actor_critic_forward.1} parent=1 // pred_check_branch
      %48 = sbr.rel (0) target = $region29
    $region28: #{actor_critic_forward.1} parent=1 // pred_region
      %49 = dma.done [#allocation5], 2048
    $region29: #{actor_critic_forward.1} parent=1 // pred_fallthru
      _
    %v50 = vld [vmem:[%s0] sm:$0xff]
    %v51 = vld [vmem:[#allocation2] sm:$0xff]
    %v52 = vld [vmem:[#allocation2 + $0x8] sm:$0xff]
    %v53 = vld [vmem:[%s2] sm:$0x1]
    %v55 = vlaneseq
    %v56 = vshrl.u32 %v55, 7
    %v57 = vsub.s32 0, %v56
    %v58 = vrot.slane %v53, %v57
    %vm60 = vcmask 130048
    %v62 = vsel %vm60, %v50, 0
    %64 = vmatprep.subr.mxu0 0.0
    %65 = vmatpush1.msra.mxu0 0.0
    %66 = vmatprep.subr.mxu0 0.0
    %67 = vmatpush1.msra.mxu0 0.0
    %68 = vmatprep.subr.mxu0 0.0
    %69 = vmatpush1.msra.mxu0 0.0
    %70 = vmatprep.subr.mxu0 0.0
    %71 = vmatpush1.msra.mxu0 0.0
    %72 = vmatprep.subr.mxu0 0.0
    %73 = vmatpush1.msra.mxu0 0.0
    %74 = vmatprep.subr.mxu0 0.0
    %75 = vmatpush1.msra.mxu0 0.0
    %76 = vmatprep.subr.mxu0 0.0
    %77 = vmatpush1.msra.mxu0 0.0
    %78 = vmatprep.subr.mxu0 0.0
    %79 = vmatpush1.msra.mxu0 0.0
    %80 = vmatprep.subr.mxu0 0.0
    %81 = vmatpush1.msra.mxu0 0.0
    %82 = vmatprep.subr.mxu0 0.0
    %83 = vmatpush1.msra.mxu0 0.0
    %84 = vmatprep.subr.mxu0 0.0
    %85 = vmatpush1.msra.mxu0 0.0
    %86 = vmatprep.subr.mxu0 0.0
    %87 = vmatpush1.msra.mxu0 0.0
    %88 = vmatprep.subr.mxu0 0.0
    %89 = vmatpush1.msra.mxu0 0.0
    %90 = vmatprep.subr.mxu0 0.0
    %91 = vmatpush1.msra.mxu0 0.0
    %92 = vmatprep.subr.mxu0 0.0
    %93 = vmatpush1.msra.mxu0 %v52
    %94 = vmatprep.subr.mxu0 0.0
    %95 = vmatpush1.msra.mxu0 %v51
    %96 = vmatprep.subr.mxu0 0.0
    %97 = vmatpush2.msra.mxu0 0.0
    %98 = vmatprep.subr.mxu0 0.0
    %99 = vmatpush2.msra.mxu0 0.0
    %100 = vmatprep.subr.mxu0 0.0
    %101 = vmatpush2.msra.mxu0 0.0
    %102 = vmatprep.subr.mxu0 0.0
    %103 = vmatpush2.msra.mxu0 0.0
    %104 = vmatprep.subr.mxu0 0.0
    %105 = vmatpush2.msra.mxu0 0.0
    %106 = vmatprep.subr.mxu0 0.0
    %107 = vmatpush2.msra.mxu0 0.0
    %108 = vmatprep.subr.mxu0 0.0
    %109 = vmatpush2.msra.mxu0 0.0
    %110 = vmatprep.subr.mxu0 0.0
    %111 = vmatpush2.msra.mxu0 0.0
    %112 = vmatprep.subr.mxu0 0.0
    %113 = vmatpush2.msra.mxu0 0.0
    %114 = vmatprep.subr.mxu0 0.0
    %115 = vmatpush2.msra.mxu0 0.0
    %116 = vmatprep.subr.mxu0 0.0
    %117 = vmatpush2.msra.mxu0 0.0
    %118 = vmatprep.subr.mxu0 0.0
    %119 = vmatpush2.msra.mxu0 0.0
    %120 = vmatprep.subr.mxu0 0.0
    %121 = vmatpush2.msra.mxu0 0.0
    %122 = vmatprep.subr.mxu0 0.0
    %123 = vmatpush2.msra.mxu0 0.0
    %124 = vmatprep.subr.mxu0 0.0
    %125 = vmatpush2.msra.mxu0 0.0
    %126 = vmatprep.subr.mxu0 0.0
    %127 = vmatpush2.msra.mxu0 0.0
    %128 = vmatprep.mubr.f32.mxu0 0.0
    %129 = vmatmul.mubr.f32.gmra.mxu0 %v62
    %v130 = vpop.f32.mrf.mxu0
    %v131 = vadd.f32 %v58, %v130
    %v132 = vpop.f32.mrf.mxu0
    %133 = vdwg.mxu0
    %v134 = vmax.f32 %v131, 0.0
    %v135 = vld [vmem:[#allocation4] sm:$0xff]
    %v136 = vld [vmem:[#allocation4 + $0x8] sm:$0xff]
    %v137 = vld [vmem:[#allocation4 + $0x10] sm:$0xff]
    %v138 = vld [vmem:[#allocation4 + $0x18] sm:$0xff]
    %v139 = vld [vmem:[#allocation4 + $0x20] sm:$0xff]
    %v140 = vld [vmem:[#allocation4 + $0x28] sm:$0xff]
    %v141 = vld [vmem:[#allocation4 + $0x30] sm:$0xff]
    %v142 = vld [vmem:[#allocation4 + $0x38] sm:$0xff]
    %v143 = vld [vmem:[#allocation4 + $0x40] sm:$0xff]
    %v144 = vld [vmem:[#allocation4 + $0x48] sm:$0xff]
    %v145 = vld [vmem:[#allocation4 + $0x50] sm:$0xff]
    %v146 = vld [vmem:[#allocation4 + $0x58] sm:$0xff]
    %v147 = vld [vmem:[#allocation4 + $0x60] sm:$0xff]
    %v148 = vld [vmem:[#allocation4 + $0x68] sm:$0xff]
    %v149 = vld [vmem:[#allocation4 + $0x70] sm:$0xff]
    %v150 = vld [vmem:[#allocation4 + $0x78] sm:$0xff]
    %v151 = vld [vmem:[%s4] sm:$0x1]
    %v153 = vlaneseq
    %v154 = vshrl.u32 %v153, 7
    %v155 = vsub.s32 0, %v154
    %v156 = vrot.slane %v151, %v155
    %158 = vmatprep.subr.mxu0 0.0
    %159 = vmatpush1.msra.mxu0 %v150
    %160 = vmatprep.subr.mxu0 0.0
    %161 = vmatpush1.msra.mxu0 %v149
    %162 = vmatprep.subr.mxu0 0.0
    %163 = vmatpush1.msra.mxu0 %v148
    %164 = vmatprep.subr.mxu0 0.0
    %165 = vmatpush1.msra.mxu0 %v147
    %166 = vmatprep.subr.mxu0 0.0
    %167 = vmatpush1.msra.mxu0 %v146
    %168 = vmatprep.subr.mxu0 0.0
    %169 = vmatpush1.msra.mxu0 %v145
    %170 = vmatprep.subr.mxu0 0.0
    %171 = vmatpush1.msra.mxu0 %v144
    %172 = vmatprep.subr.mxu0 0.0
    %173 = vmatpush1.msra.mxu0 %v143
    %174 = vmatprep.subr.mxu0 0.0
    %175 = vmatpush1.msra.mxu0 %v142
    %176 = vmatprep.subr.mxu0 0.0
    %177 = vmatpush1.msra.mxu0 %v141
    %178 = vmatprep.subr.mxu0 0.0
    %179 = vmatpush1.msra.mxu0 %v140
    %180 = vmatprep.subr.mxu0 0.0
    %181 = vmatpush1.msra.mxu0 %v139
    %182 = vmatprep.subr.mxu0 0.0
    %183 = vmatpush1.msra.mxu0 %v138
    %184 = vmatprep.subr.mxu0 0.0
    %185 = vmatpush1.msra.mxu0 %v137
    %186 = vmatprep.subr.mxu0 0.0
    %187 = vmatpush1.msra.mxu0 %v136
    %188 = vmatprep.subr.mxu0 0.0
    %189 = vmatpush1.msra.mxu0 %v135
    %190 = vmatprep.subr.mxu0 0.0
    %191 = vmatpush2.msra.mxu0 0.0
    %192 = vmatprep.subr.mxu0 0.0
    %193 = vmatpush2.msra.mxu0 0.0
    %194 = vmatprep.subr.mxu0 0.0
    %195 = vmatpush2.msra.mxu0 0.0
    %196 = vmatprep.subr.mxu0 0.0
    %197 = vmatpush2.msra.mxu0 0.0
    %198 = vmatprep.subr.mxu0 0.0
    %199 = vmatpush2.msra.mxu0 0.0
    %200 = vmatprep.subr.mxu0 0.0
    %201 = vmatpush2.msra.mxu0 0.0
    %202 = vmatprep.subr.mxu0 0.0
    %203 = vmatpush2.msra.mxu0 0.0
    %204 = vmatprep.subr.mxu0 0.0
    %205 = vmatpush2.msra.mxu0 0.0
    %206 = vmatprep.subr.mxu0 0.0
    %207 = vmatpush2.msra.mxu0 0.0
    %208 = vmatprep.subr.mxu0 0.0
    %209 = vmatpush2.msra.mxu0 0.0
    %210 = vmatprep.subr.mxu0 0.0
    %211 = vmatpush2.msra.mxu0 0.0
    %212 = vmatprep.subr.mxu0 0.0
    %213 = vmatpush2.msra.mxu0 0.0
    %214 = vmatprep.subr.mxu0 0.0
    %215 = vmatpush2.msra.mxu0 0.0
    %216 = vmatprep.subr.mxu0 0.0
    %217 = vmatpush2.msra.mxu0 0.0
    %218 = vmatprep.subr.mxu0 0.0
    %219 = vmatpush2.msra.mxu0 0.0
    %220 = vmatprep.subr.mxu0 0.0
    %221 = vmatpush2.msra.mxu0 0.0
    %222 = vmatprep.mubr.f32.mxu0 0.0
    %223 = vmatmul.mubr.f32.gmra.mxu0 %v134
    %v224 = vpop.f32.mrf.mxu0
    %v225 = vadd.f32 %v156, %v224
    %v226 = vpop.f32.mrf.mxu0
    %227 = vdwg.mxu0
    %vm228 = vcmask 64512
    %229 = vst.msk [vmem:[%s5] sm:$0xff] %vm228, %v225
    %231 = vrot.lane.b32.xlu0 %v225, 120
    %v232 = vpop.permute.xlu0 %231
    %vm234 = vcmask 7168
    %235 = vst.msk [vmem:[%s6] sm:$0xff] %vm234, %v232
    // Predicated region
    $region30: #{actor_critic_forward.1} parent=1 // pred_check
      _
    $region31: #{actor_critic_forward.1} parent=1 // pred_check_branch
      %237 = sbr.rel (0) target = $region33
    $region32: #{actor_critic_forward.1} parent=1 // pred_region
      _
    $region33: #{actor_critic_forward.1} parent=1 // pred_fallthru
      _
    // Predicated region
    $region34: #{actor_critic_forward.1} parent=1 // pred_check
      _
    $region35: #{actor_critic_forward.1} parent=1 // pred_check_branch
      %239 = sbr.rel (0) target = $region37
    $region36: #{actor_critic_forward.1} parent=1 // pred_region
      _
    $region37: #{actor_critic_forward.1} parent=1 // pred_fallthru
      _
    // Predicated region
    $region38: #{actor_critic_forward.1} parent=1 // pred_check
      _
    $region39: #{actor_critic_forward.1} parent=1 // pred_check_branch
      %241 = sbr.rel (0) target = $region41
    $region40: #{actor_critic_forward.1} parent=1 // pred_region
      _
    $region41: #{actor_critic_forward.1} parent=1 // pred_fallthru
      _
    // Predicated region
    $region42: #{actor_critic_forward.1} parent=1 // pred_check
      _
    $region43: #{actor_critic_forward.1} parent=1 // pred_check_branch
      %243 = sbr.rel (0) target = $region45
    $region44: #{actor_critic_forward.1} parent=1 // pred_region
      _
    $region45: #{actor_critic_forward.1} parent=1 // pred_fallthru
      _
    %244 = vsyncpa [#allocation3], 1
    %245 = vsyncpa [#allocation5], 1

</llo_original>
